<compile_context>
chip_gen: v7x
topology: tpu7x:2x2x1
jax: 0.10.0
libtpu: 0.0.40
codegen_flags: <defaults>
</compile_context>

<pallas_src>
import functools

import jax
import jax.numpy as jnp
from jax.experimental import pallas as pl
from jax.experimental.pallas import tpu as pltpu

EPS = 1e-5

# Tunables (safe across v5e / v6e / v7x).
_RESIDENT_MAX_F32_BYTES = 4 * 1024 * 1024   # use the fused resident kernel when x (as f32) <= 4 MiB
_ROW_TILE_TARGET = 256                      # streaming: target rows per tile
_LANE_TILE_TARGET = 4096                    # streaming: target lanes per tile (multiple of 128)
_VMEM_LIMIT_BYTES = 40 * 1024 * 1024        # < v7x 64 MiB physical; > v5e/v7x scoped defaults


def _round_up(v, q):
    return -(-v // q) * q


def _row_quantum(dtype):
    """Sublane quantum for packed layouts: 8 rows (4-byte), 16 (2-byte), 32 (1-byte)."""
    return {4: 8, 2: 16, 1: 32}.get(jnp.dtype(dtype).itemsize, 8)


def _pick_tile(dim, target, quantum):
    """Largest multiple of `quantum` that divides `dim` and is <= target, else the full dim.

    Callers pad `dim` to a multiple of `quantum` whenever dim > target, so the search
    always succeeds there; dim <= target returns the full dim (a block equal to the full
    array dim is always legal)."""
    if dim <= target:
        return dim
    t = (target // quantum) * quantum
    while t >= quantum:
        if dim % t == 0:
            return t
        t -= quantum
    return dim


# --------------------------------------------------------------------------------------
# Path A: whole tensor resident in VMEM -> single fused kernel (stats + normalize + affine)
# --------------------------------------------------------------------------------------

def _resident_bn_kernel(x_ref, gamma_ref, beta_ref, o_ref, *, inv_m, eps):
    """x_ref / o_ref: (N, C, HW); gamma_ref / beta_ref: (1, C, 1).

    Reads x once, writes y once (2x HBM traffic).  Variance uses the numerically robust
    two-pass form E[(x - mean)^2]; the second pass is free because x is VMEM-resident.
    """
    x = x_ref[...].astype(jnp.float32)
    s = jnp.sum(jnp.sum(x, axis=2, keepdims=True), axis=0, keepdims=True)       # (1, C, 1)
    mean = s * inv_m
    d = x - mean
    var = jnp.sum(jnp.sum(d * d, axis=2, keepdims=True), axis=0, keepdims=True) * inv_m
    scale = gamma_ref[...].astype(jnp.float32) * jax.lax.rsqrt(var + eps)        # (1, C, 1)
    o_ref[...] = (d * scale + beta_ref[...].astype(jnp.float32)).astype(o_ref.dtype)


def _bn_resident(x_nchw, gamma, beta, eps):
    N, C, H, W = x_nchw.shape
    HW = H * W
    x3 = x_nchw.reshape(N, C, HW)                      # copy-free view of NCHW
    kernel = functools.partial(_resident_bn_kernel,
                               inv_m=1.0 / float(N * HW), eps=float(eps))
    out3 = pl.pallas_call(
        kernel,
        out_shape=jax.ShapeDtypeStruct((N, C, HW), x_nchw.dtype),
        compiler_params=pltpu.CompilerParams(vmem_limit_bytes=_VMEM_LIMIT_BYTES),
    )(x3, gamma.reshape(1, C, 1), beta.reshape(1, C, 1))
    return out3.reshape(N, C, H, W)


# --------------------------------------------------------------------------------------
# Path B: streaming two-pass for tensors that do not fit VMEM
# --------------------------------------------------------------------------------------

def _stats_kernel(x_ref, sum_ref, sq_ref):
    """Per-row sum / sum-of-squares partials for one (row-tile, lane-tile) block.

    x_ref: (TR, THW) with THW a multiple of 128.
    sum_ref / sq_ref: (1, TR, 1) partial slots indexed by the lane-tile grid axis, so both
    grid axes are fully parallel (v7x megacore sharding) and no cross-step accumulator is
    needed.  Accumulation over lanes is done in lane-aligned 128-wide chunks (pure VALU
    adds) with a single 128 -> 1 cross-lane reduce at the end.
    """
    x = x_ref[...].astype(jnp.float32)
    tr, thw = x.shape
    acc_s = jnp.zeros((tr, 128), jnp.float32)
    acc_q = jnp.zeros((tr, 128), jnp.float32)
    for k in range(thw // 128):                       # static, lane-aligned slices
        c = x[:, k * 128:(k + 1) * 128]
        acc_s = acc_s + c
        acc_q = acc_q + c * c
    sum_ref[0] = jnp.sum(acc_s, axis=1, keepdims=True)
    sq_ref[0] = jnp.sum(acc_q, axis=1, keepdims=True)


def _apply_kernel(x_ref, scale_ref, shift_ref, o_ref):
    """y = x * scale + shift with per-row (TR, 1) scale/shift broadcast along lanes."""
    x = x_ref[...].astype(jnp.float32)
    o_ref[...] = (x * scale_ref[...] + shift_ref[...]).astype(o_ref.dtype)


def _bn_streaming(x_nchw, gamma, beta, eps):
    N, C, H, W = x_nchw.shape
    HW = H * W
    NC = N * C
    dt = x_nchw.dtype

    x2d = x_nchw.reshape(NC, HW)                      # copy-free view: row r <-> (n, c) = (r // C, r % C)

    # --- hardened tiling: pad to legal tile quanta (zeros are neutral for the sums;
    #     padded rows/lanes are sliced off the output). Padding only triggers for
    #     ragged shapes (H*W not a multiple of 128, or huge non-divisible N*C).
    q_row = _row_quantum(dt)
    HW_pad = _round_up(HW, 128)
    NC_pad = NC if NC <= _ROW_TILE_TARGET else _round_up(NC, q_row)
    if HW_pad != HW or NC_pad != NC:
        x2d = jnp.pad(x2d, ((0, NC_pad - NC), (0, HW_pad - HW)))

    TR = _pick_tile(NC_pad, _ROW_TILE_TARGET, q_row)
    THW = _pick_tile(HW_pad, _LANE_TILE_TARGET, 128)
    grid_r = NC_pad // TR
    grid_h = HW_pad // THW

    # ---- Pass 1: per-row partial sums, one partial slot per lane tile (both axes parallel) ----
    partial_sum, partial_sq = pl.pallas_call(
        _stats_kernel,
        out_shape=(jax.ShapeDtypeStruct((grid_h, NC_pad, 1), jnp.float32),
                   jax.ShapeDtypeStruct((grid_h, NC_pad, 1), jnp.float32)),
        grid_spec=pltpu.PrefetchScalarGridSpec(
            num_scalar_prefetch=0,
            grid=(grid_r, grid_h),
            in_specs=[pl.BlockSpec((TR, THW), lambda i, j: (i, j))],
            out_specs=(pl.BlockSpec((1, TR, 1), lambda i, j: (j, i, 0)),
                       pl.BlockSpec((1, TR, 1), lambda i, j: (j, i, 0)))),
        compiler_params=pltpu.CompilerParams(
            dimension_semantics=("parallel", "parallel"),
            vmem_limit_bytes=_VMEM_LIMIT_BYTES),
    )(x2d)

    # ---- Tiny per-channel scalar math (C values; negligible vs the streaming passes) ----
    # TODO(synk): E[x^2] - E[x]^2 in f32 can cancel for far-from-zero-mean data at very
    # large N*H*W; the resident path uses the exact two-pass form instead.
    row_sum = jnp.sum(partial_sum[:, :NC, 0], axis=0)          # (NC,)
    row_sq = jnp.sum(partial_sq[:, :NC, 0], axis=0)
    m = jnp.float32(N * HW)
    ch_sum = row_sum.reshape(N, C).sum(axis=0)
    ch_sq = row_sq.reshape(N, C).sum(axis=0)
    mean = ch_sum / m
    var = jnp.maximum(ch_sq / m - mean * mean, 0.0)            # biased variance (training norm)
    scale_c = gamma.astype(jnp.float32) * jax.lax.rsqrt(var + eps)
    shift_c = beta.astype(jnp.float32) - mean * scale_c
    scale_rows = jnp.tile(scale_c, (N,))
    shift_rows = jnp.tile(shift_c, (N,))
    if NC_pad != NC:
        scale_rows = jnp.pad(scale_rows, (0, NC_pad - NC))
        shift_rows = jnp.pad(shift_rows, (0, NC_pad - NC))
    scale_rows = scale_rows.reshape(NC_pad, 1)
    shift_rows = shift_rows.reshape(NC_pad, 1)

    # ---- Pass 2: fused normalize + affine, fully parallel elementwise grid ----
    out2d = pl.pallas_call(
        _apply_kernel,
        out_shape=jax.ShapeDtypeStruct((NC_pad, HW_pad), dt),
        grid_spec=pltpu.PrefetchScalarGridSpec(
            num_scalar_prefetch=0,
            grid=(grid_r, grid_h),
            in_specs=[pl.BlockSpec((TR, THW), lambda i, j: (i, j)),
                      pl.BlockSpec((TR, 1), lambda i, j: (i, 0)),
                      pl.BlockSpec((TR, 1), lambda i, j: (i, 0))],
            out_specs=pl.BlockSpec((TR, THW), lambda i, j: (i, j))),
        compiler_params=pltpu.CompilerParams(
            dimension_semantics=("parallel", "parallel"),
            vmem_limit_bytes=_VMEM_LIMIT_BYTES),
    )(x2d, scale_rows, shift_rows)

    out2d = out2d[:NC, :HW]
    return out2d.reshape(N, C, H, W)
    # TODO(synk): a single-kernel "phase" variant (stats phase + apply phase in one launch)
    # would also remove the second launch for the large-x case; x is still read twice from
    # HBM there, so the benefit is only launch overhead and it is intentionally not done.


# --------------------------------------------------------------------------------------
# Dispatcher
# --------------------------------------------------------------------------------------

def batchnorm2d_train(x_nchw, gamma, beta, eps=EPS):
    """x_nchw: (N, C, H, W). gamma/beta: (C,). Training-mode BatchNorm2d output."""
    N, C, H, W = x_nchw.shape
    f32_bytes = N * C * H * W * 4
    if f32_bytes <= _RESIDENT_MAX_F32_BYTES:
        return _bn_resident(x_nchw, gamma, beta, eps)
    return _bn_streaming(x_nchw, gamma, beta, eps)


def _reference_bn(x, gamma, beta, eps=EPS):
    mean = jnp.mean(x, axis=(0, 2, 3), keepdims=True)
    var = jnp.mean((x - mean) ** 2, axis=(0, 2, 3), keepdims=True)
    C = x.shape[1]
    return ((x - mean) * jax.lax.rsqrt(var + eps) * gamma.reshape(1, C, 1, 1)
            + beta.reshape(1, C, 1, 1))


if __name__ == "__main__":
    key = jax.random.PRNGKey(0)
    # Small shapes consistent with the module (Conv2d/BatchNorm2d over 4 channels).
    N, C, H, W = 2, 4, 16, 16
    x = jax.random.normal(key, (N, C, H, W), dtype=jnp.float32)

    # PyTorch BatchNorm2d default parameter init: weight=1, bias=0.
    gamma = jnp.ones((C,), dtype=jnp.float32)
    beta = jnp.zeros((C,), dtype=jnp.float32)

    # TODO(synk): self.conv(x) in the reference forward is dead code (its result `t` is never
    # used or returned), so the convolution is intentionally not executed.
    # TODO(synk): running_mean/running_var buffer updates are not reproduced (they do not
    # affect the returned value).

    # Default dispatch: small tensor -> fused single-kernel resident path.
    out = jax.block_until_ready(batchnorm2d_train(x, gamma, beta))
    ref = _reference_bn(x, gamma, beta)
    assert out.shape == x.shape and out.dtype == x.dtype
    assert jnp.max(jnp.abs(out - ref)) < 1e-4

    # Also exercise the streaming (two-pass) path, including the ragged lane-padding
    # fallback (H*W = 324 -> padded to 384) and a multi-lane-tile grid (H*W = 9216 -> 3 tiles).
    x2 = jax.random.normal(jax.random.PRNGKey(1), (2, 4, 18, 18), dtype=jnp.float32)
    out2 = jax.block_until_ready(_bn_streaming(x2, gamma, beta, EPS))
    assert jnp.max(jnp.abs(out2 - _reference_bn(x2, gamma, beta))) < 1e-4

    x3 = jax.random.normal(jax.random.PRNGKey(2), (1, 4, 96, 96), dtype=jnp.float32)
    out3 = jax.block_until_ready(_bn_streaming(x3, gamma, beta, EPS))
    assert jnp.max(jnp.abs(out3 - _reference_bn(x3, gamma, beta))) < 1e-4

    print("KERNEL_OK")
</pallas_src>

<mosaic_0001>
module attributes {stable_mosaic.version = 11 : i64} {
  func.func @_resident_bn_kernel(%arg0: memref<2x4x256xf32, #tpu.memory_space<vmem>>, %arg1: memref<1x4x1xf32, #tpu.memory_space<vmem>>, %arg2: memref<1x4x1xf32, #tpu.memory_space<vmem>>, %arg3: memref<2x4x256xf32, #tpu.memory_space<vmem>>) attributes {dimension_semantics = [], scalar_prefetch = 0 : i64, scratch_operands = 0 : i64, tpu.core_type = #tpu.core_type<tc>} {
    %c0 = arith.constant 0 : index
    %c0_0 = arith.constant 0 : index
    %c0_1 = arith.constant 0 : index
    %0 = vector.load %arg0[%c0, %c0_0, %c0_1] : memref<2x4x256xf32, #tpu.memory_space<vmem>>, vector<2x4x256xf32>
    %cst = arith.constant dense<0.000000e+00> : vector<2x4xf32>
    %1 = vector.multi_reduction <add>, %0, %cst [2] : vector<2x4x256xf32> to vector<2x4xf32>
    %2 = vector.shape_cast %1 : vector<2x4xf32> to vector<2x4x1xf32>
    %cst_2 = arith.constant dense<0.000000e+00> : vector<4x1xf32>
    %3 = vector.multi_reduction <add>, %2, %cst_2 [0] : vector<2x4x1xf32> to vector<4x1xf32>
    %4 = vector.shape_cast %3 : vector<4x1xf32> to vector<1x4x1xf32>
    %cst_3 = arith.constant 0.001953125 : f32
    %5 = vector.broadcast %cst_3 : f32 to vector<1x4x1xf32>
    %6 = arith.mulf %4, %5 : vector<1x4x1xf32>
    %7 = vector.broadcast %6 : vector<1x4x1xf32> to vector<2x4x256xf32>
    %8 = arith.subf %0, %7 : vector<2x4x256xf32>
    %9 = arith.mulf %8, %8 : vector<2x4x256xf32>
    %cst_4 = arith.constant dense<0.000000e+00> : vector<2x4xf32>
    %10 = vector.multi_reduction <add>, %9, %cst_4 [2] : vector<2x4x256xf32> to vector<2x4xf32>
    %11 = vector.shape_cast %10 : vector<2x4xf32> to vector<2x4x1xf32>
    %cst_5 = arith.constant dense<0.000000e+00> : vector<4x1xf32>
    %12 = vector.multi_reduction <add>, %11, %cst_5 [0] : vector<2x4x1xf32> to vector<4x1xf32>
    %13 = vector.shape_cast %12 : vector<4x1xf32> to vector<1x4x1xf32>
    %cst_6 = arith.constant 0.001953125 : f32
    %14 = vector.broadcast %cst_6 : f32 to vector<1x4x1xf32>
    %15 = arith.mulf %13, %14 : vector<1x4x1xf32>
    %c0_7 = arith.constant 0 : index
    %c0_8 = arith.constant 0 : index
    %c0_9 = arith.constant 0 : index
    %16 = vector.load %arg1[%c0_7, %c0_8, %c0_9] : memref<1x4x1xf32, #tpu.memory_space<vmem>>, vector<1x4x1xf32>
    %cst_10 = arith.constant 9.99999974E-6 : f32
    %17 = vector.broadcast %cst_10 : f32 to vector<1x4x1xf32>
    %18 = arith.addf %15, %17 : vector<1x4x1xf32>
    %19 = math.rsqrt %18 : vector<1x4x1xf32>
    %20 = arith.mulf %16, %19 : vector<1x4x1xf32>
    %21 = vector.broadcast %20 : vector<1x4x1xf32> to vector<2x4x256xf32>
    %22 = arith.mulf %8, %21 : vector<2x4x256xf32>
    %c0_11 = arith.constant 0 : index
    %c0_12 = arith.constant 0 : index
    %c0_13 = arith.constant 0 : index
    %23 = vector.load %arg2[%c0_11, %c0_12, %c0_13] : memref<1x4x1xf32, #tpu.memory_space<vmem>>, vector<1x4x1xf32>
    %24 = vector.broadcast %23 : vector<1x4x1xf32> to vector<2x4x256xf32>
    %25 = arith.addf %22, %24 : vector<2x4x256xf32>
    %c0_14 = arith.constant 0 : index
    %c0_15 = arith.constant 0 : index
    %c0_16 = arith.constant 0 : index
    %26 = vector.load %arg3[%c0_14, %c0_15, %c0_16] : memref<2x4x256xf32, #tpu.memory_space<vmem>>, vector<2x4x256xf32>
    tpu.vector_store %arg3[%c0_14, %c0_15, %c0_16], %25 {strides = array<i32>} : memref<2x4x256xf32, #tpu.memory_space<vmem>>, vector<2x4x256xf32>,
    return
  }
}

</mosaic_0001>

<llo_original>
// kernel: tpu_custom_call.1
$region0: #{tpu_custom_call.1}
  #allocation0 [shape = 'u32[]', space=smem, size = 0x4, offset = 0x4, fixed_abs, tag = 'smem constant byte address 0x4 - core index']
  #allocation1 [shape = 'u32[144,128]{1,0:T(1,128)}', space=vmem, size = 0x12000, scoped, tag = 'internal scratch']
  %s0 = inlined_call_operand.hbm [shape: f32[2,4,256], index: 0, kind: input, shape index: {}]
  %s1 = inlined_call_operand.vmem [shape: f32[1,4,1], index: 1, kind: input, shape index: {}]
  %s2 = inlined_call_operand.vmem [shape: f32[1,4,1], index: 2, kind: input, shape index: {}]
  %s3 = inlined_call_operand.hbm [shape: f32[2,4,256], index: 3, kind: output, shape index: {}]
  %s4 = sld [smem:[#allocation0]]
  $region26: #{tpu_custom_call.1} parent=0
    _
  %s6 = ssub.s32 1, %s4
  %s7 = scalar_select 0, %s6, %s4
  $region1: #{tpu_custom_call.1} parent=0
    #allocation2 [shape = 'u8[8192]{0}', space=vmem, size = 0x2000, scoped, tag = 'input window, operand 0, single buffered']
    #allocation3 [shape = 's32[1]{0}', space=sflag, size = 0x4, scoped, tag = 'scoped memory for tpu_custom_call.1']
    #allocation4 [shape = 's32[1]{0}', space=sflag, size = 0x4, scoped, tag = 'scoped memory for tpu_custom_call.1']
    #allocation5 [shape = 'u8[8192]{0}', space=vmem, size = 0x2000, scoped, tag = 'output window, operand 0, single buffered']
    %8 = vsyncpa [#allocation3], 0
    %9 = vsyncpa [#allocation4], 0
    // Predicated region
    $region2: #{tpu_custom_call.1} parent=1 // pred_check
      _
    $region3: #{tpu_custom_call.1} parent=1 // pred_check_branch
      %11 = sbr.rel (0) target = $region5
    $region4: #{tpu_custom_call.1} parent=1 // pred_region
      %s13 = ssub.s32 256, 256
      %14 = vsyncadd [#allocation3], %s13
      %s15 = sshll.u32 [#allocation2], 4
      %s16 = int_to_ptr.vmem [resolvable:$true] %s15
      %21 = dma.hbm_to_vmem [thread:$0]  %s0, 256, %s16, [#allocation3], 128, 128, 8
    $region5: #{tpu_custom_call.1} parent=1 // pred_fallthru
      _
    // Predicated region
    $region6: #{tpu_custom_call.1} parent=1 // pred_check
      _
    $region7: #{tpu_custom_call.1} parent=1 // pred_check_branch
      %23 = sbr.rel (0) target = $region9
    $region8: #{tpu_custom_call.1} parent=1 // pred_region
      _
    $region9: #{tpu_custom_call.1} parent=1 // pred_fallthru
      _
    // Predicated region
    $region10: #{tpu_custom_call.1} parent=1 // pred_check
      _
    $region11: #{tpu_custom_call.1} parent=1 // pred_check_branch
      %25 = sbr.rel (0) target = $region13
    $region12: #{tpu_custom_call.1} parent=1 // pred_region
      _
    $region13: #{tpu_custom_call.1} parent=1 // pred_fallthru
      _
    // Predicated region
    $region14: #{tpu_custom_call.1} parent=1 // pred_check
      _
    $region15: #{tpu_custom_call.1} parent=1 // pred_check_branch
      %27 = sbr.rel (0) target = $region17
    $region16: #{tpu_custom_call.1} parent=1 // pred_region
      %28 = dma.done [#allocation3], 256
    $region17: #{tpu_custom_call.1} parent=1 // pred_fallthru
      _
    %v29 = vld [vmem:[#allocation2] sm:$0xff]
    %v30 = vld [vmem:[#allocation2 + $0x8] sm:$0xff]
    %v33 = vcombine.high %v29, %v29
    %v34 = vcombine.high %v30, %v30
    %vm37 = vcmask 1043456
    %v38 = vsel %vm37, %v29, 0.0
    %v39 = vsel %vm37, %v33, 0.0
    %v40 = vadd.f32 %v38, %v39
    %41 = vadd.xlane.f32.xlu0 %v40
    %v42 = vpop.xlane.xlu0 %41
    %v43 = vsel %vm37, %v30, 0.0
    %v44 = vsel %vm37, %v34, 0.0
    %v45 = vadd.f32 %v43, %v44
    %46 = vadd.xlane.f32.xlu0 %v45
    %v47 = vpop.xlane.xlu0 %46
    %v48 = vsel %vm37, %v42, 0.0
    %v49 = vsel %vm37, %v47, 0.0
    %v50 = vadd.f32 %v48, %v49
    %v51 = vmul.f32 %v50, 0.001953125
    %v54 = vunpack.c.l.s4 839922192
    %v55 = vunpack.c.0.s8 %v54
    %v56 = vlaneseq
    %v57 = vshrl.u32 %v56, 7
    %v58 = vsub.s32 %v55, %v57
    %v59 = vrot.slane %v51, %v58
    %v61 = vsub.f32 %v29, %v59
    %v62 = vsub.f32 %v30, %v59
    %v63 = vmul.f32 %v61, %v61
    %v64 = vmul.f32 %v62, %v62
    %v67 = vcombine.high %v63, %v63
    %v68 = vcombine.high %v64, %v64
    %v71 = vsel %vm37, %v63, 0.0
    %v72 = vsel %vm37, %v67, 0.0
    %v73 = vadd.f32 %v71, %v72
    %74 = vadd.xlane.f32.xlu0 %v73
    %v75 = vpop.xlane.xlu0 %74
    %v76 = vsel %vm37, %v64, 0.0
    %v77 = vsel %vm37, %v68, 0.0
    %v78 = vadd.f32 %v76, %v77
    %79 = vadd.xlane.f32.xlu0 %v78
    %v80 = vpop.xlane.xlu0 %79
    %v81 = vsel %vm37, %v75, 0.0
    %v82 = vsel %vm37, %v80, 0.0
    %v83 = vadd.f32 %v81, %v82
    %v84 = vmul.f32 %v83, 0.001953125
    %v85 = vld [vmem:[%s1] sm:$0xf]
    %v86 = vadd.f32 %v84, 1e-05
    %v87 = vrsqrt.pop %v86
    %v88 = vmul.f32 %v85, %v87
    %90 = vset.pattern.permute.xlu0 0
    %91 = vperm.xlu0 %90, %v88
    %v92 = vpop.permute.xlu0 %91
    %v94 = vunpack.c.l.s4 839922192
    %v95 = vunpack.c.0.s8 %v94
    %v96 = vlaneseq
    %v97 = vshrl.u32 %v96, 7
    %v98 = vsub.s32 %v95, %v97
    %v99 = vrot.slane %v92, %v98
    %v101 = vmul.f32 %v61, %v99
    %v102 = vmul.f32 %v62, %v99
    %v103 = vld [vmem:[%s2] sm:$0xf]
    %105 = vset.pattern.permute.xlu0 0
    %106 = vperm.xlu0 %105, %v103
    %v107 = vpop.permute.xlu0 %106
    %v109 = vunpack.c.l.s4 839922192
    %v110 = vunpack.c.0.s8 %v109
    %v111 = vlaneseq
    %v112 = vshrl.u32 %v111, 7
    %v113 = vsub.s32 %v110, %v112
    %v114 = vrot.slane %v107, %v113
    %v116 = vadd.f32 %v101, %v114
    %v117 = vadd.f32 %v102, %v114
    %118 = vst [vmem:[#allocation5] sm:$0xff] %v116
    %119 = vst [vmem:[#allocation5 + $0x8] sm:$0xff] %v117
    // Predicated region
    $region18: #{tpu_custom_call.1} parent=1 // pred_check
      _
    $region19: #{tpu_custom_call.1} parent=1 // pred_check_branch
      %121 = sbr.rel (0) target = $region21
    $region20: #{tpu_custom_call.1} parent=1 // pred_region
      %s123 = ssub.s32 256, 256
      %124 = vsyncadd [#allocation4], %s123
      %s125 = sshll.u32 [#allocation5], 4
      %s126 = int_to_ptr.vmem [resolvable:$true] %s125
      %131 = dma.vmem_to_hbm [thread:$0]  %s126, 256, %s3, [#allocation4], 128, 128, 8
    $region21: #{tpu_custom_call.1} parent=1 // pred_fallthru
      _
    // Predicated region
    $region22: #{tpu_custom_call.1} parent=1 // pred_check
      _
    $region23: #{tpu_custom_call.1} parent=1 // pred_check_branch
      %133 = sbr.rel (0) target = $region25
    $region24: #{tpu_custom_call.1} parent=1 // pred_region
      %134 = dma.done [#allocation4], 256
    $region25: #{tpu_custom_call.1} parent=1 // pred_fallthru
      _
    %135 = vsyncpa [#allocation3], 1
    %136 = vsyncpa [#allocation4], 1

</llo_original>
